<compile_context>
chip_gen: v6e
topology: v6e:2x2x1
jax: 0.10.0
libtpu: 0.0.40
codegen_flags: <defaults>
</compile_context>

<pallas_src>
import functools

import jax
import jax.numpy as jnp
from jax.experimental import pallas as pl
from jax.experimental.pallas import tpu as pltpu

LEAKY_SLOPE = 0.01   # F.leaky_relu default
LN_EPS = 1e-6


def _round_up(x, m):
    return (x + m - 1) // m * m


def _layernorm(x, gamma, beta, eps):
    # Matches the PyTorch LayerNorm in model.py:
    #   mean over last dim; torch.std -> *unbiased* (ddof=1) std; divide by (std+eps)
    # Centered form (cancellation-safe); 1/(std+eps) folded into one rsqrt:
    #   rsqrt(var + eps^2) == 1/(std+eps) at var==0 and differs by ~eps/std otherwise.
    n = x.shape[-1]
    mean = jnp.sum(x, axis=-1, keepdims=True) * (1.0 / n)
    c = x - mean
    var = jnp.sum(c * c, axis=-1, keepdims=True) * (1.0 / (n - 1))
    inv = jax.lax.rsqrt(var + eps * eps)
    return gamma * (c * inv) + beta


def _leaky_relu(x):
    # identical to where(x>0, x, a*x) for 0 < a < 1, one fewer VPU op
    return jnp.maximum(x, LEAKY_SLOPE * x)


def actor_kernel(x_ref, w1_ref, w2_ref, w3_ref, p_ref, out_ref, *, f1, f2, a_pad):
    x = x_ref[...]
    p = p_ref[...]                       # [8, PACK_W] packed small params

    b1, g1, be1 = p[0:1, 0:f1], p[1:2, 0:f1], p[2:3, 0:f1]
    b2, g2, be2 = p[3:4, 0:f2], p[4:5, 0:f2], p[5:6, 0:f2]
    b3 = p[6:7, 0:a_pad]

    # fc1 -> ln1 -> leaky_relu
    h = jnp.dot(x, w1_ref[...], preferred_element_type=jnp.float32) + b1
    h = _leaky_relu(_layernorm(h, g1, be1, LN_EPS))

    # fc2 -> ln2 -> leaky_relu
    h = jnp.dot(h, w2_ref[...], preferred_element_type=jnp.float32) + b2
    h = _leaky_relu(_layernorm(h, g2, be2, LN_EPS))

    # fc3 -> tanh  (clamp is redundant: tanh range is [-1, 1])
    h = jnp.dot(h, w3_ref[...], preferred_element_type=jnp.float32) + b3
    out_ref[...] = jnp.tanh(h).astype(out_ref.dtype)


def prepare_actor_params(params):
    """One-time preprocessing (hoisted out of the per-call hot path).

    Returns (prep, action_size): prep holds f32 weights, the lane-dense
    zero-padded w3, and the 7 small 1-D params packed into one [8, PACK_W]
    VMEM tile (a single DMA inside the kernel).
    """
    F1 = params["w1"].shape[1]
    F2 = params["w2"].shape[1]
    A = params["w3"].shape[1]
    A_pad = _round_up(A, 128)
    # Robust packing width: supports fc1/fc2 widths > 128 as well.
    PACK_W = _round_up(max(128, F1, F2, A_pad), 128)

    w1 = params["w1"].astype(jnp.float32)
    w2 = params["w2"].astype(jnp.float32)
    w3p = jnp.pad(params["w3"].astype(jnp.float32), ((0, 0), (0, A_pad - A)))

    def row(v):
        v = v.reshape(1, -1).astype(jnp.float32)
        return jnp.pad(v, ((0, 0), (0, PACK_W - v.shape[1])))

    packed = jnp.concatenate(
        [row(params["b1"]), row(params["g1"]), row(params["be1"]),
         row(params["b2"]), row(params["g2"]), row(params["be2"]),
         row(params["b3"]), jnp.zeros((1, PACK_W), jnp.float32)],
        axis=0)

    prep = {"w1": w1, "w2": w2, "w3p": w3p, "packed": packed}
    return prep, A


def _choose_batch_tile(B):
    """Tile the batch axis.

    * tiny batches: single tile (grid of 1; per-step overhead dominates anyway)
    * B_pad8 > 256: tile = min(1024, round_up(B/2, 256)) -> large tiles AND
      >= 2 grid steps so the "parallel" axis can shard across v7x's two TCs.
    """
    B8 = _round_up(B, 8)
    if B8 <= 256:
        Bt = B8
    else:
        half = -(-B8 // 2)
        Bt = min(1024, _round_up(half, 256))
    B_pad = _round_up(B8, Bt)
    return Bt, B_pad, B_pad // Bt


@functools.partial(jax.jit, static_argnames=("action_size",))
def actor_forward(state, prep, *, action_size):
    """state: [B, state_size] (or [state_size]); prep: from prepare_actor_params."""
    if state.ndim == 1:
        state = state[None, :]
    B, S = state.shape
    F1 = prep["w1"].shape[1]
    F2 = prep["w2"].shape[1]
    A_pad = prep["w3p"].shape[1]
    PACK_W = prep["packed"].shape[1]

    Bt, B_pad, n_steps = _choose_batch_tile(B)

    state_p = jnp.pad(state.astype(jnp.float32), ((0, B_pad - B), (0, 0)))

    kernel = functools.partial(actor_kernel, f1=F1, f2=F2, a_pad=A_pad)

    flops = 2 * B_pad * (S * F1 + F1 * F2 + F2 * A_pad)
    bytes_accessed = 4 * (B_pad * S + S * F1 + F1 * F2 + F2 * A_pad
                          + 8 * PACK_W + B_pad * A_pad)
    cost = pl.CostEstimate(flops=flops,
                           transcendentals=B_pad * (A_pad + 4),
                           bytes_accessed=bytes_accessed)

    out_pad = pl.pallas_call(
        kernel,
        out_shape=jax.ShapeDtypeStruct((B_pad, A_pad), jnp.float32),
        grid=(n_steps,),
        in_specs=[
            pl.BlockSpec((Bt, S), lambda i: (i, 0)),          # state tile (pipelined)
            pl.BlockSpec((S, F1), lambda i: (0, 0)),          # weights stay resident
            pl.BlockSpec((F1, F2), lambda i: (0, 0)),
            pl.BlockSpec((F2, A_pad), lambda i: (0, 0)),
            pl.BlockSpec((8, PACK_W), lambda i: (0, 0)),      # packed small params
        ],
        out_specs=pl.BlockSpec((Bt, A_pad), lambda i: (i, 0)),
        compiler_params=pltpu.CompilerParams(
            dimension_semantics=("parallel",)),               # shard across TCs (v7x)
        cost_estimate=cost,
    )(state_p, prep["w1"], prep["w2"], prep["w3p"], prep["packed"])

    return out_pad[:B, :action_size]


def init_actor_params(key, state_size, action_size, fc1_units=64, fc2_units=32):
    """Deterministic init mirroring the PyTorch module's reset_parameters."""
    ks = jax.random.split(key, 6)

    def uni(k, shape, lim):
        return jax.random.uniform(k, shape, jnp.float32, -lim, lim)

    # hidden_init uses weight.size()[0] == out_features in PyTorch
    w1 = uni(ks[0], (state_size, fc1_units), 1.0 / jnp.sqrt(fc1_units))
    w2 = uni(ks[1], (fc1_units, fc2_units), 1.0 / jnp.sqrt(fc2_units))
    w3 = uni(ks[2], (fc2_units, action_size), 0.003)
    # biases keep default nn.Linear init: U(-1/sqrt(in_features), +1/sqrt(in_features))
    b1 = uni(ks[3], (fc1_units,), 1.0 / jnp.sqrt(state_size))
    b2 = uni(ks[4], (fc2_units,), 1.0 / jnp.sqrt(fc1_units))
    b3 = uni(ks[5], (action_size,), 1.0 / jnp.sqrt(fc2_units))
    return {
        "w1": w1, "b1": b1,
        "g1": jnp.ones((fc1_units,), jnp.float32),
        "be1": jnp.zeros((fc1_units,), jnp.float32),
        "w2": w2, "b2": b2,
        "g2": jnp.ones((fc2_units,), jnp.float32),
        "be2": jnp.zeros((fc2_units,), jnp.float32),
        "w3": w3, "b3": b3,
    }


def actor_forward_ref(state, params):
    """Pure-JAX reference matching the PyTorch module (centered-form LayerNorm)."""
    def ln(x, g, b):
        n = x.shape[-1]
        m = jnp.mean(x, -1, keepdims=True)
        c = x - m
        std = jnp.sqrt(jnp.sum(c * c, -1, keepdims=True) / (n - 1))  # unbiased std
        return g * c / (std + LN_EPS) + b

    h = state @ params["w1"] + params["b1"]
    t = ln(h, params["g1"], params["be1"])
    h = jnp.where(t > 0, t, LEAKY_SLOPE * t)
    h = h @ params["w2"] + params["b2"]
    t = ln(h, params["g2"], params["be2"])
    h = jnp.where(t > 0, t, LEAKY_SLOPE * t)
    h = h @ params["w3"] + params["b3"]
    return jnp.clip(jnp.tanh(h), -1.0, 1.0)


if __name__ == "__main__":
    key = jax.random.PRNGKey(0)
    k_param, k_state = jax.random.split(key)

    B, state_size, action_size = 8, 16, 8
    params = init_actor_params(k_param, state_size, action_size)
    state = jax.random.normal(k_state, (B, state_size), jnp.float32)

    prep, A = prepare_actor_params(params)   # one-time, outside the hot path

    action = actor_forward(state, prep, action_size=A)
    jax.block_until_ready(action)

    ref = actor_forward_ref(state, params)
    assert action.shape == (B, action_size)
    # Tolerance 1e-4: the kernel folds 1/(std+eps) into rsqrt(var+eps^2),
    # which differs from the exact centered form at the ~1e-6 relative level.
    assert jnp.allclose(action, ref, atol=1e-4, rtol=1e-4), "mismatch vs JAX reference"

    print("KERNEL_OK")
</pallas_src>

<mosaic_0001>
module attributes {stable_mosaic.version = 11 : i64} {
  func.func @actor_kernel(%arg0: i32, %arg1: memref<8x16xf32, #tpu.memory_space<vmem>>, %arg2: memref<16x64xf32, #tpu.memory_space<vmem>>, %arg3: memref<64x32xf32, #tpu.memory_space<vmem>>, %arg4: memref<32x128xf32, #tpu.memory_space<vmem>>, %arg5: memref<8x128xf32, #tpu.memory_space<vmem>>, %arg6: memref<8x128xf32, #tpu.memory_space<vmem>>) attributes {dimension_semantics = [#tpu.dimension_semantics<parallel>], iteration_bounds = array<i64: 1>, scalar_prefetch = 0 : i64, scratch_operands = 0 : i64, tpu.core_type = #tpu.core_type<tc>, window_params = [{transform_indices = @transform_0, window_bounds = array<i64: 8, 16>}, {pipeline_mode = #tpu.pipeline_mode<synchronous>, transform_indices = @transform_1, window_bounds = array<i64: 16, 64>}, {pipeline_mode = #tpu.pipeline_mode<synchronous>, transform_indices = @transform_2, window_bounds = array<i64: 64, 32>}, {pipeline_mode = #tpu.pipeline_mode<synchronous>, transform_indices = @transform_3, window_bounds = array<i64: 32, 128>}, {pipeline_mode = #tpu.pipeline_mode<synchronous>, transform_indices = @transform_4, window_bounds = array<i64: 8, 128>}, {transform_indices = @transform_5, window_bounds = array<i64: 8, 128>}]} {
    %c0 = arith.constant 0 : index
    %c0_0 = arith.constant 0 : index
    %0 = vector.load %arg1[%c0, %c0_0] : memref<8x16xf32, #tpu.memory_space<vmem>>, vector<8x16xf32>
    %c0_1 = arith.constant 0 : index
    %c0_2 = arith.constant 0 : index
    %1 = vector.load %arg5[%c0_1, %c0_2] : memref<8x128xf32, #tpu.memory_space<vmem>>, vector<8x128xf32>
    %2 = vector.extract_strided_slice %1 {offsets = [0, 0], sizes = [1, 64], strides = [1, 1]} : vector<8x128xf32> to vector<1x64xf32>
    %3 = vector.extract_strided_slice %1 {offsets = [1, 0], sizes = [1, 64], strides = [1, 1]} : vector<8x128xf32> to vector<1x64xf32>
    %4 = vector.extract_strided_slice %1 {offsets = [2, 0], sizes = [1, 64], strides = [1, 1]} : vector<8x128xf32> to vector<1x64xf32>
    %5 = vector.extract_strided_slice %1 {offsets = [3, 0], sizes = [1, 32], strides = [1, 1]} : vector<8x128xf32> to vector<1x32xf32>
    %6 = vector.extract_strided_slice %1 {offsets = [4, 0], sizes = [1, 32], strides = [1, 1]} : vector<8x128xf32> to vector<1x32xf32>
    %7 = vector.extract_strided_slice %1 {offsets = [5, 0], sizes = [1, 32], strides = [1, 1]} : vector<8x128xf32> to vector<1x32xf32>
    %8 = vector.extract_strided_slice %1 {offsets = [6, 0], sizes = [1, 128], strides = [1, 1]} : vector<8x128xf32> to vector<1x128xf32>
    %c0_3 = arith.constant 0 : index
    %c0_4 = arith.constant 0 : index
    %9 = vector.load %arg2[%c0_3, %c0_4] : memref<16x64xf32, #tpu.memory_space<vmem>>, vector<16x64xf32>
    %cst = arith.constant dense<0.000000e+00> : vector<8x64xf32>
    %10 = tpu.matmul %0, %9, %cst {dimension_numbers = #tpu.dot_dimension_numbers<[1], [0], [0], [1], [0, 0, 1, 1], [], []>} : vector<8x16xf32>, vector<16x64xf32>, vector<8x64xf32> -> vector<8x64xf32>
    %11 = vector.broadcast %2 : vector<1x64xf32> to vector<8x64xf32>
    %12 = arith.addf %10, %11 : vector<8x64xf32>
    %cst_5 = arith.constant dense<0.000000e+00> : vector<8xf32>
    %13 = vector.multi_reduction <add>, %12, %cst_5 [1] : vector<8x64xf32> to vector<8xf32>
    %14 = vector.shape_cast %13 : vector<8xf32> to vector<8x1xf32>
    %cst_6 = arith.constant 1.562500e-02 : f32
    %15 = vector.broadcast %cst_6 : f32 to vector<8x1xf32>
    %16 = arith.mulf %14, %15 : vector<8x1xf32>
    %17 = vector.broadcast %16 : vector<8x1xf32> to vector<8x64xf32>
    %18 = arith.subf %12, %17 : vector<8x64xf32>
    %19 = arith.mulf %18, %18 : vector<8x64xf32>
    %cst_7 = arith.constant dense<0.000000e+00> : vector<8xf32>
    %20 = vector.multi_reduction <add>, %19, %cst_7 [1] : vector<8x64xf32> to vector<8xf32>
    %21 = vector.shape_cast %20 : vector<8xf32> to vector<8x1xf32>
    %cst_8 = arith.constant 0.0158730168 : f32
    %22 = vector.broadcast %cst_8 : f32 to vector<8x1xf32>
    %23 = arith.mulf %21, %22 : vector<8x1xf32>
    %cst_9 = arith.constant 9.99999996E-13 : f32
    %24 = vector.broadcast %cst_9 : f32 to vector<8x1xf32>
    %25 = arith.addf %23, %24 : vector<8x1xf32>
    %26 = math.rsqrt %25 : vector<8x1xf32>
    %27 = vector.broadcast %26 : vector<8x1xf32> to vector<8x64xf32>
    %28 = arith.mulf %18, %27 : vector<8x64xf32>
    %29 = vector.broadcast %3 : vector<1x64xf32> to vector<8x64xf32>
    %30 = arith.mulf %29, %28 : vector<8x64xf32>
    %31 = vector.broadcast %4 : vector<1x64xf32> to vector<8x64xf32>
    %32 = arith.addf %30, %31 : vector<8x64xf32>
    %cst_10 = arith.constant 0.00999999977 : f32
    %33 = vector.broadcast %cst_10 : f32 to vector<8x64xf32>
    %34 = arith.mulf %33, %32 : vector<8x64xf32>
    %35 = arith.maximumf %32, %34 : vector<8x64xf32>
    %c0_11 = arith.constant 0 : index
    %c0_12 = arith.constant 0 : index
    %36 = vector.load %arg3[%c0_11, %c0_12] : memref<64x32xf32, #tpu.memory_space<vmem>>, vector<64x32xf32>
    %cst_13 = arith.constant dense<0.000000e+00> : vector<8x32xf32>
    %37 = tpu.matmul %35, %36, %cst_13 {dimension_numbers = #tpu.dot_dimension_numbers<[1], [0], [0], [1], [0, 0, 1, 1], [], []>} : vector<8x64xf32>, vector<64x32xf32>, vector<8x32xf32> -> vector<8x32xf32>
    %38 = vector.broadcast %5 : vector<1x32xf32> to vector<8x32xf32>
    %39 = arith.addf %37, %38 : vector<8x32xf32>
    %cst_14 = arith.constant dense<0.000000e+00> : vector<8xf32>
    %40 = vector.multi_reduction <add>, %39, %cst_14 [1] : vector<8x32xf32> to vector<8xf32>
    %41 = vector.shape_cast %40 : vector<8xf32> to vector<8x1xf32>
    %cst_15 = arith.constant 3.125000e-02 : f32
    %42 = vector.broadcast %cst_15 : f32 to vector<8x1xf32>
    %43 = arith.mulf %41, %42 : vector<8x1xf32>
    %44 = vector.broadcast %43 : vector<8x1xf32> to vector<8x32xf32>
    %45 = arith.subf %39, %44 : vector<8x32xf32>
    %46 = arith.mulf %45, %45 : vector<8x32xf32>
    %cst_16 = arith.constant dense<0.000000e+00> : vector<8xf32>
    %47 = vector.multi_reduction <add>, %46, %cst_16 [1] : vector<8x32xf32> to vector<8xf32>
    %48 = vector.shape_cast %47 : vector<8xf32> to vector<8x1xf32>
    %cst_17 = arith.constant 0.0322580636 : f32
    %49 = vector.broadcast %cst_17 : f32 to vector<8x1xf32>
    %50 = arith.mulf %48, %49 : vector<8x1xf32>
    %cst_18 = arith.constant 9.99999996E-13 : f32
    %51 = vector.broadcast %cst_18 : f32 to vector<8x1xf32>
    %52 = arith.addf %50, %51 : vector<8x1xf32>
    %53 = math.rsqrt %52 : vector<8x1xf32>
    %54 = vector.broadcast %53 : vector<8x1xf32> to vector<8x32xf32>
    %55 = arith.mulf %45, %54 : vector<8x32xf32>
    %56 = vector.broadcast %6 : vector<1x32xf32> to vector<8x32xf32>
    %57 = arith.mulf %56, %55 : vector<8x32xf32>
    %58 = vector.broadcast %7 : vector<1x32xf32> to vector<8x32xf32>
    %59 = arith.addf %57, %58 : vector<8x32xf32>
    %cst_19 = arith.constant 0.00999999977 : f32
    %60 = vector.broadcast %cst_19 : f32 to vector<8x32xf32>
    %61 = arith.mulf %60, %59 : vector<8x32xf32>
    %62 = arith.maximumf %59, %61 : vector<8x32xf32>
    %c0_20 = arith.constant 0 : index
    %c0_21 = arith.constant 0 : index
    %63 = vector.load %arg4[%c0_20, %c0_21] : memref<32x128xf32, #tpu.memory_space<vmem>>, vector<32x128xf32>
    %cst_22 = arith.constant dense<0.000000e+00> : vector<8x128xf32>
    %64 = tpu.matmul %62, %63, %cst_22 {dimension_numbers = #tpu.dot_dimension_numbers<[1], [0], [0], [1], [0, 0, 1, 1], [], []>} : vector<8x32xf32>, vector<32x128xf32>, vector<8x128xf32> -> vector<8x128xf32>
    %65 = vector.broadcast %8 : vector<1x128xf32> to vector<8x128xf32>
    %66 = arith.addf %64, %65 : vector<8x128xf32>
    %67 = math.tanh %66 : vector<8x128xf32>
    %c0_23 = arith.constant 0 : index
    %c0_24 = arith.constant 0 : index
    %68 = vector.load %arg6[%c0_23, %c0_24] : memref<8x128xf32, #tpu.memory_space<vmem>>, vector<8x128xf32>
    tpu.vector_store %arg6[%c0_23, %c0_24], %67 {strides = array<i32>} : memref<8x128xf32, #tpu.memory_space<vmem>>, vector<8x128xf32>,
    return
  }
  func.func @transform_0(%arg0: i32) -> (i32, i32) {
    %c0_i32 = arith.constant 0 : i32
    %c0_i32_0 = arith.constant 0 : i32
    return %arg0, %c0_i32 : i32, i32
  }
  func.func @transform_1(%arg0: i32) -> (i32, i32) {
    %c0_i32 = arith.constant 0 : i32
    %c0_i32_0 = arith.constant 0 : i32
    %c0_i32_1 = arith.constant 0 : i32
    return %c0_i32, %c0_i32_0 : i32, i32
  }
  func.func @transform_2(%arg0: i32) -> (i32, i32) {
    %c0_i32 = arith.constant 0 : i32
    %c0_i32_0 = arith.constant 0 : i32
    %c0_i32_1 = arith.constant 0 : i32
    return %c0_i32, %c0_i32_0 : i32, i32
  }
  func.func @transform_3(%arg0: i32) -> (i32, i32) {
    %c0_i32 = arith.constant 0 : i32
    %c0_i32_0 = arith.constant 0 : i32
    %c0_i32_1 = arith.constant 0 : i32
    return %c0_i32, %c0_i32_0 : i32, i32
  }
  func.func @transform_4(%arg0: i32) -> (i32, i32) {
    %c0_i32 = arith.constant 0 : i32
    %c0_i32_0 = arith.constant 0 : i32
    %c0_i32_1 = arith.constant 0 : i32
    return %c0_i32, %c0_i32_0 : i32, i32
  }
  func.func @transform_5(%arg0: i32) -> (i32, i32) {
    %c0_i32 = arith.constant 0 : i32
    %c0_i32_0 = arith.constant 0 : i32
    return %arg0, %c0_i32 : i32, i32
  }
}

</mosaic_0001>

<llo_original>
// kernel: actor_forward.1
$region0: #{actor_forward.1}
  #allocation0 [shape = 'u32[]', space=smem, size = 0x4, offset = 0x4, fixed_abs, tag = 'smem constant byte address 0x4 - core index']
  #allocation1 [shape = 'u32[144,128]{1,0:T(1,128)}', space=vmem, size = 0x12000, scoped, tag = 'internal scratch']
  %s0 = inlined_call_operand.vmem [shape: f32[8,16], index: 0, kind: input, shape index: {}]
  %s1 = inlined_call_operand.vmem [shape: f32[16,64], index: 1, kind: input, shape index: {}]
  %s2 = inlined_call_operand.vmem [shape: f32[64,32], index: 2, kind: input, shape index: {}]
  %s3 = inlined_call_operand.vmem [shape: f32[32,128], index: 3, kind: input, shape index: {}]
  %s4 = inlined_call_operand.vmem [shape: f32[8,128], index: 4, kind: input, shape index: {}]
  %s5 = inlined_call_operand.hbm [shape: f32[8,128], index: 5, kind: output, shape index: {}]
  %s6 = sld [smem:[#allocation0]]
  $region30: #{actor_forward.1} parent=0
    _
  %s8 = ssub.s32 1, %s6
  %s9 = scalar_select 0, %s8, %s6
  $region1: #{actor_forward.1} parent=0
    #allocation2 [shape = 'u8[4096]{0}', space=vmem, size = 0x1000, scoped, tag = 'output window, operand 0, single buffered']
    #allocation3 [shape = 's32[1]{0}', space=sflag, size = 0x4, scoped, tag = 'scoped memory for actor_forward.1']
    %10 = vsyncpa [#allocation3], 0
    // Predicated region
    $region2: #{actor_forward.1} parent=1 // pred_check
      _
    $region3: #{actor_forward.1} parent=1 // pred_check_branch
      %12 = sbr.rel (0) target = $region5
    $region4: #{actor_forward.1} parent=1 // pred_region
      _
    $region5: #{actor_forward.1} parent=1 // pred_fallthru
      _
    // Predicated region
    $region6: #{actor_forward.1} parent=1 // pred_check
      _
    $region7: #{actor_forward.1} parent=1 // pred_check_branch
      %14 = sbr.rel (0) target = $region9
    $region8: #{actor_forward.1} parent=1 // pred_region
      _
    $region9: #{actor_forward.1} parent=1 // pred_fallthru
      _
    // Predicated region
    $region10: #{actor_forward.1} parent=1 // pred_check
      _
    $region11: #{actor_forward.1} parent=1 // pred_check_branch
      %16 = sbr.rel (0) target = $region13
    $region12: #{actor_forward.1} parent=1 // pred_region
      _
    $region13: #{actor_forward.1} parent=1 // pred_fallthru
      _
    // Predicated region
    $region14: #{actor_forward.1} parent=1 // pred_check
      _
    $region15: #{actor_forward.1} parent=1 // pred_check_branch
      %18 = sbr.rel (0) target = $region17
    $region16: #{actor_forward.1} parent=1 // pred_region
      _
    $region17: #{actor_forward.1} parent=1 // pred_fallthru
      _
    // Predicated region
    $region18: #{actor_forward.1} parent=1 // pred_check
      _
    $region19: #{actor_forward.1} parent=1 // pred_check_branch
      %20 = sbr.rel (0) target = $region21
    $region20: #{actor_forward.1} parent=1 // pred_region
      _
    $region21: #{actor_forward.1} parent=1 // pred_fallthru
      _
    %v21 = vld [vmem:[%s0] sm:$0xff]
    %v22 = vld [vmem:[%s4] sm:$0xff]
    %v23 = vld [vmem:[%s1] sm:$0xff]
    %v24 = vld [vmem:[%s1 + $0x8] sm:$0xff]
    %v25 = vlaneseq
    %v26 = vshrl.u32 %v25, 7
    %v27 = vsub.s32 0, %v26
    %v28 = vrot.slane %v22, %v27
    %vm29 = vcmask 130048
    %v31 = vsel %vm29, %v21, 0
    %33 = vmatprep.subr.mxu0 0.0
    %34 = vmatpush1.msra.mxu0 0.0
    %35 = vmatprep.subr.mxu0 0.0
    %36 = vmatpush1.msra.mxu0 0.0
    %37 = vmatprep.subr.mxu0 0.0
    %38 = vmatpush1.msra.mxu0 0.0
    %39 = vmatprep.subr.mxu0 0.0
    %40 = vmatpush1.msra.mxu0 0.0
    %41 = vmatprep.subr.mxu0 0.0
    %42 = vmatpush1.msra.mxu0 0.0
    %43 = vmatprep.subr.mxu0 0.0
    %44 = vmatpush1.msra.mxu0 0.0
    %45 = vmatprep.subr.mxu0 0.0
    %46 = vmatpush1.msra.mxu0 0.0
    %47 = vmatprep.subr.mxu0 0.0
    %48 = vmatpush1.msra.mxu0 0.0
    %49 = vmatprep.subr.mxu0 0.0
    %50 = vmatpush1.msra.mxu0 0.0
    %51 = vmatprep.subr.mxu0 0.0
    %52 = vmatpush1.msra.mxu0 0.0
    %53 = vmatprep.subr.mxu0 0.0
    %54 = vmatpush1.msra.mxu0 0.0
    %55 = vmatprep.subr.mxu0 0.0
    %56 = vmatpush1.msra.mxu0 0.0
    %57 = vmatprep.subr.mxu0 0.0
    %58 = vmatpush1.msra.mxu0 0.0
    %59 = vmatprep.subr.mxu0 0.0
    %60 = vmatpush1.msra.mxu0 0.0
    %61 = vmatprep.subr.mxu0 0.0
    %62 = vmatpush1.msra.mxu0 %v24
    %63 = vmatprep.subr.mxu0 0.0
    %64 = vmatpush1.msra.mxu0 %v23
    %65 = vmatprep.subr.mxu0 0.0
    %66 = vmatpush2.msra.mxu0 0.0
    %67 = vmatprep.subr.mxu0 0.0
    %68 = vmatpush2.msra.mxu0 0.0
    %69 = vmatprep.subr.mxu0 0.0
    %70 = vmatpush2.msra.mxu0 0.0
    %71 = vmatprep.subr.mxu0 0.0
    %72 = vmatpush2.msra.mxu0 0.0
    %73 = vmatprep.subr.mxu0 0.0
    %74 = vmatpush2.msra.mxu0 0.0
    %75 = vmatprep.subr.mxu0 0.0
    %76 = vmatpush2.msra.mxu0 0.0
    %77 = vmatprep.subr.mxu0 0.0
    %78 = vmatpush2.msra.mxu0 0.0
    %79 = vmatprep.subr.mxu0 0.0
    %80 = vmatpush2.msra.mxu0 0.0
    %81 = vmatprep.subr.mxu0 0.0
    %82 = vmatpush2.msra.mxu0 0.0
    %83 = vmatprep.subr.mxu0 0.0
    %84 = vmatpush2.msra.mxu0 0.0
    %85 = vmatprep.subr.mxu0 0.0
    %86 = vmatpush2.msra.mxu0 0.0
    %87 = vmatprep.subr.mxu0 0.0
    %88 = vmatpush2.msra.mxu0 0.0
    %89 = vmatprep.subr.mxu0 0.0
    %90 = vmatpush2.msra.mxu0 0.0
    %91 = vmatprep.subr.mxu0 0.0
    %92 = vmatpush2.msra.mxu0 0.0
    %93 = vmatprep.subr.mxu0 0.0
    %94 = vmatpush2.msra.mxu0 0.0
    %95 = vmatprep.subr.mxu0 0.0
    %96 = vmatpush2.msra.mxu0 0.0
    %97 = vmatprep.mubr.f32.mxu0 0.0
    %98 = vmatmul.mubr.f32.gmra.mxu0 %v31
    %v99 = vpop.f32.mrf.mxu0
    %v100 = vadd.f32 %v28, %v99
    %v101 = vpop.f32.mrf.mxu0
    %102 = vdwg.mxu0
    %vm103 = vcmask 523264
    %v104 = vsel %vm103, %v100, 0.0
    %105 = vadd.xlane.f32.xlu0 %v104
    %v106 = vpop.xlane.xlu0 %105
    %v107 = vmul.f32 %v106, 0.015625
    %v108 = vsub.f32 %v100, %v107
    %v109 = vmul.f32 %v108, %v108
    %v110 = vsel %vm103, %v109, 0.0
    %111 = vadd.xlane.f32.xlu0 %v110
    %v112 = vpop.xlane.xlu0 %111
    %v113 = vmul.f32 %v112, 0.015873017
    %v114 = vadd.f32 %v113, 1e-12
    %v115 = vrsqrt.pop %v114
    %v116 = vmul.f32 %v108, %v115
    %v117 = vlaneseq
    %v118 = vshrl.u32 %v117, 7
    %v119 = vsub.s32 1, %v118
    %v120 = vrot.slane %v22, %v119
    %v121 = vmul.f32 %v120, %v116
    %v122 = vlaneseq
    %v123 = vshrl.u32 %v122, 7
    %v124 = vsub.s32 2, %v123
    %v125 = vrot.slane %v22, %v124
    %v126 = vadd.f32 %v121, %v125
    %v127 = vmul.f32 %v126, 0.01
    %v128 = vmax.f32 %v126, %v127
    %v129 = vld [vmem:[%s2] sm:$0xff]
    %v130 = vld [vmem:[%s2 + $0x8] sm:$0xff]
    %v131 = vld [vmem:[%s2 + $0x10] sm:$0xff]
    %v132 = vld [vmem:[%s2 + $0x18] sm:$0xff]
    %v133 = vld [vmem:[%s2 + $0x20] sm:$0xff]
    %v134 = vld [vmem:[%s2 + $0x28] sm:$0xff]
    %v135 = vld [vmem:[%s2 + $0x30] sm:$0xff]
    %v136 = vld [vmem:[%s2 + $0x38] sm:$0xff]
    %v137 = vlaneseq
    %v138 = vshrl.u32 %v137, 7
    %v139 = vsub.s32 3, %v138
    %v140 = vrot.slane %v22, %v139
    %v142 = vsel %vm103, %v128, 0
    %144 = vmatprep.subr.mxu0 0.0
    %145 = vmatpush1.msra.mxu0 0.0
    %146 = vmatprep.subr.mxu0 0.0
    %147 = vmatpush1.msra.mxu0 0.0
    %148 = vmatprep.subr.mxu0 0.0
    %149 = vmatpush1.msra.mxu0 0.0
    %150 = vmatprep.subr.mxu0 0.0
    %151 = vmatpush1.msra.mxu0 0.0
    %152 = vmatprep.subr.mxu0 0.0
    %153 = vmatpush1.msra.mxu0 0.0
    %154 = vmatprep.subr.mxu0 0.0
    %155 = vmatpush1.msra.mxu0 0.0
    %156 = vmatprep.subr.mxu0 0.0
    %157 = vmatpush1.msra.mxu0 0.0
    %158 = vmatprep.subr.mxu0 0.0
    %159 = vmatpush1.msra.mxu0 0.0
    %160 = vmatprep.subr.mxu0 0.0
    %161 = vmatpush1.msra.mxu0 %v136
    %162 = vmatprep.subr.mxu0 0.0
    %163 = vmatpush1.msra.mxu0 %v135
    %164 = vmatprep.subr.mxu0 0.0
    %165 = vmatpush1.msra.mxu0 %v134
    %166 = vmatprep.subr.mxu0 0.0
    %167 = vmatpush1.msra.mxu0 %v133
    %168 = vmatprep.subr.mxu0 0.0
    %169 = vmatpush1.msra.mxu0 %v132
    %170 = vmatprep.subr.mxu0 0.0
    %171 = vmatpush1.msra.mxu0 %v131
    %172 = vmatprep.subr.mxu0 0.0
    %173 = vmatpush1.msra.mxu0 %v130
    %174 = vmatprep.subr.mxu0 0.0
    %175 = vmatpush1.msra.mxu0 %v129
    %176 = vmatprep.subr.mxu0 0.0
    %177 = vmatpush2.msra.mxu0 0.0
    %178 = vmatprep.subr.mxu0 0.0
    %179 = vmatpush2.msra.mxu0 0.0
    %180 = vmatprep.subr.mxu0 0.0
    %181 = vmatpush2.msra.mxu0 0.0
    %182 = vmatprep.subr.mxu0 0.0
    %183 = vmatpush2.msra.mxu0 0.0
    %184 = vmatprep.subr.mxu0 0.0
    %185 = vmatpush2.msra.mxu0 0.0
    %186 = vmatprep.subr.mxu0 0.0
    %187 = vmatpush2.msra.mxu0 0.0
    %188 = vmatprep.subr.mxu0 0.0
    %189 = vmatpush2.msra.mxu0 0.0
    %190 = vmatprep.subr.mxu0 0.0
    %191 = vmatpush2.msra.mxu0 0.0
    %192 = vmatprep.subr.mxu0 0.0
    %193 = vmatpush2.msra.mxu0 0.0
    %194 = vmatprep.subr.mxu0 0.0
    %195 = vmatpush2.msra.mxu0 0.0
    %196 = vmatprep.subr.mxu0 0.0
    %197 = vmatpush2.msra.mxu0 0.0
    %198 = vmatprep.subr.mxu0 0.0
    %199 = vmatpush2.msra.mxu0 0.0
    %200 = vmatprep.subr.mxu0 0.0
    %201 = vmatpush2.msra.mxu0 0.0
    %202 = vmatprep.subr.mxu0 0.0
    %203 = vmatpush2.msra.mxu0 0.0
    %204 = vmatprep.subr.mxu0 0.0
    %205 = vmatpush2.msra.mxu0 0.0
    %206 = vmatprep.subr.mxu0 0.0
    %207 = vmatpush2.msra.mxu0 0.0
    %208 = vmatprep.mubr.f32.mxu0 0.0
    %209 = vmatmul.mubr.f32.gmra.mxu0 %v142
    %v210 = vpop.f32.mrf.mxu0
    %v211 = vadd.f32 %v140, %v210
    %v212 = vpop.f32.mrf.mxu0
    %213 = vdwg.mxu0
    %vm214 = vcmask 261120
    %v215 = vsel %vm214, %v211, 0.0
    %216 = vadd.xlane.f32.xlu0 %v215
    %v217 = vpop.xlane.xlu0 %216
    %v218 = vmul.f32 %v217, 0.03125
    %v219 = vsub.f32 %v211, %v218
    %v220 = vmul.f32 %v219, %v219
    %v221 = vsel %vm214, %v220, 0.0
    %222 = vadd.xlane.f32.xlu0 %v221
    %v223 = vpop.xlane.xlu0 %222
    %v224 = vmul.f32 %v223, 0.032258064
    %v225 = vadd.f32 %v224, 1e-12
    %v226 = vrsqrt.pop %v225
    %v227 = vmul.f32 %v219, %v226
    %v228 = vlaneseq
    %v229 = vshrl.u32 %v228, 7
    %v230 = vsub.s32 4, %v229
    %v231 = vrot.slane %v22, %v230
    %v232 = vmul.f32 %v231, %v227
    %v233 = vlaneseq
    %v234 = vshrl.u32 %v233, 7
    %v235 = vsub.s32 5, %v234
    %v236 = vrot.slane %v22, %v235
    %v237 = vadd.f32 %v232, %v236
    %v238 = vmul.f32 %v237, 0.01
    %v239 = vmax.f32 %v237, %v238
    %v240 = vld [vmem:[%s3] sm:$0xff]
    %v241 = vld [vmem:[%s3 + $0x8] sm:$0xff]
    %v242 = vld [vmem:[%s3 + $0x10] sm:$0xff]
    %v243 = vld [vmem:[%s3 + $0x18] sm:$0xff]
    %v244 = vlaneseq
    %v245 = vshrl.u32 %v244, 7
    %v246 = vsub.s32 6, %v245
    %v247 = vrot.slane %v22, %v246
    %v249 = vsel %vm214, %v239, 0
    %251 = vmatprep.subr.mxu0 0.0
    %252 = vmatpush1.msra.mxu0 0.0
    %253 = vmatprep.subr.mxu0 0.0
    %254 = vmatpush1.msra.mxu0 0.0
    %255 = vmatprep.subr.mxu0 0.0
    %256 = vmatpush1.msra.mxu0 0.0
    %257 = vmatprep.subr.mxu0 0.0
    %258 = vmatpush1.msra.mxu0 0.0
    %259 = vmatprep.subr.mxu0 0.0
    %260 = vmatpush1.msra.mxu0 0.0
    %261 = vmatprep.subr.mxu0 0.0
    %262 = vmatpush1.msra.mxu0 0.0
    %263 = vmatprep.subr.mxu0 0.0
    %264 = vmatpush1.msra.mxu0 0.0
    %265 = vmatprep.subr.mxu0 0.0
    %266 = vmatpush1.msra.mxu0 0.0
    %267 = vmatprep.subr.mxu0 0.0
    %268 = vmatpush1.msra.mxu0 0.0
    %269 = vmatprep.subr.mxu0 0.0
    %270 = vmatpush1.msra.mxu0 0.0
    %271 = vmatprep.subr.mxu0 0.0
    %272 = vmatpush1.msra.mxu0 0.0
    %273 = vmatprep.subr.mxu0 0.0
    %274 = vmatpush1.msra.mxu0 0.0
    %275 = vmatprep.subr.mxu0 0.0
    %276 = vmatpush1.msra.mxu0 %v243
    %277 = vmatprep.subr.mxu0 0.0
    %278 = vmatpush1.msra.mxu0 %v242
    %279 = vmatprep.subr.mxu0 0.0
    %280 = vmatpush1.msra.mxu0 %v241
    %281 = vmatprep.subr.mxu0 0.0
    %282 = vmatpush1.msra.mxu0 %v240
    %283 = vmatprep.subr.mxu0 0.0
    %284 = vmatpush2.msra.mxu0 0.0
    %285 = vmatprep.subr.mxu0 0.0
    %286 = vmatpush2.msra.mxu0 0.0
    %287 = vmatprep.subr.mxu0 0.0
    %288 = vmatpush2.msra.mxu0 0.0
    %289 = vmatprep.subr.mxu0 0.0
    %290 = vmatpush2.msra.mxu0 0.0
    %291 = vmatprep.subr.mxu0 0.0
    %292 = vmatpush2.msra.mxu0 0.0
    %293 = vmatprep.subr.mxu0 0.0
    %294 = vmatpush2.msra.mxu0 0.0
    %295 = vmatprep.subr.mxu0 0.0
    %296 = vmatpush2.msra.mxu0 0.0
    %297 = vmatprep.subr.mxu0 0.0
    %298 = vmatpush2.msra.mxu0 0.0
    %299 = vmatprep.subr.mxu0 0.0
    %300 = vmatpush2.msra.mxu0 0.0
    %301 = vmatprep.subr.mxu0 0.0
    %302 = vmatpush2.msra.mxu0 0.0
    %303 = vmatprep.subr.mxu0 0.0
    %304 = vmatpush2.msra.mxu0 0.0
    %305 = vmatprep.subr.mxu0 0.0
    %306 = vmatpush2.msra.mxu0 0.0
    %307 = vmatprep.subr.mxu0 0.0
    %308 = vmatpush2.msra.mxu0 0.0
    %309 = vmatprep.subr.mxu0 0.0
    %310 = vmatpush2.msra.mxu0 0.0
    %311 = vmatprep.subr.mxu0 0.0
    %312 = vmatpush2.msra.mxu0 0.0
    %313 = vmatprep.subr.mxu0 0.0
    %314 = vmatpush2.msra.mxu0 0.0
    %315 = vmatprep.mubr.f32.mxu0 0.0
    %316 = vmatmul.mubr.f32.gmra.mxu0 %v249
    %v317 = vpop.f32.mrf.mxu0
    %v318 = vadd.f32 %v247, %v317
    %v319 = vpop.f32.mrf.mxu0
    %320 = vdwg.mxu0
    %v321 = vtanh.pop %v318
    %322 = vst [vmem:[#allocation2] sm:$0xff] %v321
    // Predicated region
    $region22: #{actor_forward.1} parent=1 // pred_check
      _
    $region23: #{actor_forward.1} parent=1 // pred_check_branch
      %324 = sbr.rel (0) target = $region25
    $region24: #{actor_forward.1} parent=1 // pred_region
      %s326 = ssub.s32 128, 128
      %327 = vsyncadd [#allocation3], %s326
      %s329 = sshll.u32 [#allocation2], 4
      %s330 = int_to_ptr.vmem [resolvable:$true] %s329
      %332 = dma.vmem_to_hbm [thread:$0]  %s330, 128, %s5, [#allocation3]
    $region25: #{actor_forward.1} parent=1 // pred_fallthru
      _
    // Predicated region
    $region26: #{actor_forward.1} parent=1 // pred_check
      _
    $region27: #{actor_forward.1} parent=1 // pred_check_branch
      %334 = sbr.rel (0) target = $region29
    $region28: #{actor_forward.1} parent=1 // pred_region
      %335 = dma.done [#allocation3], 128
    $region29: #{actor_forward.1} parent=1 // pred_fallthru
      _
    %336 = vsyncpa [#allocation3], 1

</llo_original>
